<compile_context>
chip_gen: v5e
topology: v5e:2x2
jax: 0.10.0
libtpu: 0.0.40
codegen_flags: <defaults>
</compile_context>

<pallas_src>
import functools

import jax
import jax.numpy as jnp
from jax import lax
from jax.experimental import pallas as pl
from jax.experimental.pallas import tpu as pltpu


def _round_up(x: int, m: int) -> int:
    return (x + m - 1) // m * m


def _sim_matmul_kernel(v_ref, t_ref, o_ref):
    # v_ref: [tm, Hp]  (rows already L2-normalized, bf16/f32)
    # t_ref: [Hp, tn]  (t already L2-normalized per row and transposed)
    # o_ref: [tm, tn]  f32
    # Pure canonical MXU matmul with f32 accumulation; the kernel body has no
    # VPU/EUP/XLU work so the MXU is the only saturating slot.
    o_ref[...] = jnp.dot(
        v_ref[...], t_ref[...], preferred_element_type=jnp.float32
    ).astype(o_ref.dtype)


def _row_normalize(x: jax.Array, out_dtype, eps: float = 1e-12) -> jax.Array:
    """L2-normalize rows in f32 (eps-clamped like F.normalize), then cast."""
    xf = x.astype(jnp.float32)
    inv = lax.rsqrt(jnp.maximum(jnp.sum(xf * xf, axis=1, keepdims=True), eps))
    return (xf * inv).astype(out_dtype)


def _vmem_budget_bytes() -> int:
    """Conservative per-kernel VMEM budget for the current chip generation."""
    try:
        cap = int(pltpu.get_tpu_info().vmem_capacity_bytes)
    except Exception:  # pragma: no cover - older runtimes
        cap = 64 * 1024 * 1024  # v7x per-TC physical VMEM (smallest generation)
    return int(0.6 * cap)


def cosine_similarity_pallas(
    v_feats: jax.Array,
    t_feats: jax.Array,
    *,
    tile_m: int = 512,
    tile_n: int = 512,
    use_bf16_matmul: bool = True,
) -> jax.Array:
    """v_feats: [Nv, H], t_feats: [Nt, H] -> [Nv, Nt] cosine-similarity matrix."""
    nv, h = v_feats.shape
    nt, h2 = t_feats.shape
    assert h == h2, (h, h2)

    in_dtype = jnp.bfloat16 if use_bf16_matmul else jnp.float32
    in_bytes = 2 if use_bf16_matmul else 4

    # Pad H to a lane multiple (zero columns are dot neutral); tiles sublane /
    # lane aligned (tm % 16 for bf16 packing, tn % 128 for lane-dense stores).
    hp = _round_up(h, 128)
    tm = min(tile_m, _round_up(nv, 16))
    tn = min(tile_n, _round_up(nt, 128))

    budget = _vmem_budget_bytes()

    def footprint(tm_, tn_):
        # double-buffered v tile + t tile + output tile
        return 2 * (tm_ * hp * in_bytes + hp * tn_ * in_bytes + tm_ * tn_ * 4)

    # Shrink tiles until (footprint + 2x margin for compiler intermediates)
    # fits the per-generation budget.
    while footprint(tm, tn) * 2 > budget and (tm > 16 or tn > 128):
        if tm >= tn and tm > 16:
            tm = max(16, _round_up(tm // 2, 16))
        elif tn > 128:
            tn = max(128, _round_up(tn // 2, 128))
        else:
            tm = max(16, _round_up(tm // 2, 16))

    nvp = _round_up(nv, tm)
    ntp = _round_up(nt, tn)

    # Single fused XLA pre-pass per operand: f32 rsqrt row-normalize -> cast ->
    # pad; t is additionally stored transposed so the kernel RHS is [K, N].
    v_p = jnp.pad(_row_normalize(v_feats, in_dtype), ((0, nvp - nv), (0, hp - h)))
    t_p = jnp.pad(_row_normalize(t_feats, in_dtype), ((0, ntp - nt), (0, hp - h))).T

    grid_i = nvp // tm
    grid_j = ntp // tn

    # Megacore: put the axis with the most blocks outermost so both
    # TensorCores (v7x) receive work; both axes independent -> "parallel".
    if grid_j > grid_i:
        grid = (grid_j, grid_i)
        v_map = lambda a, b: (b, 0)
        t_map = lambda a, b: (0, a)
        o_map = lambda a, b: (b, a)
    else:
        grid = (grid_i, grid_j)
        v_map = lambda a, b: (a, 0)
        t_map = lambda a, b: (0, b)
        o_map = lambda a, b: (a, b)

    vmem_limit = min(budget, max(2 * footprint(tm, tn), 16 * 1024 * 1024))

    out_p = pl.pallas_call(
        _sim_matmul_kernel,
        out_shape=jax.ShapeDtypeStruct((nvp, ntp), jnp.float32),
        grid_spec=pltpu.PrefetchScalarGridSpec(
            num_scalar_prefetch=0,
            grid=grid,
            in_specs=[
                pl.BlockSpec((tm, hp), v_map),   # pre-normalized v rows
                pl.BlockSpec((hp, tn), t_map),   # pre-normalized t, transposed
            ],
            out_specs=pl.BlockSpec((tm, tn), o_map),
        ),
        compiler_params=pltpu.CompilerParams(
            dimension_semantics=("parallel", "parallel"),
            vmem_limit_bytes=vmem_limit,
        ),
    )(v_p, t_p)

    # Padded rows/columns (zero, non-NaN thanks to the eps clamp) sliced away.
    return out_p[:nv, :nt]


@functools.partial(jax.jit, static_argnames=("use_bf16_matmul",))
def _attention_forward(visual_table, text_table, visual_input, text_input,
                       use_bf16_matmul=True):
    # Embedding gathers stay as plain-JAX glue fused (under jit) with the
    # normalize/cast/pad pre-pass feeding the Pallas matmul kernel.
    v = jnp.squeeze(jnp.take(visual_table, visual_input, axis=0), axis=1)  # [Nv, H]
    t = jnp.squeeze(jnp.take(text_table, text_input, axis=0), axis=1)      # [Nt, H]
    return cosine_similarity_pallas(v, t, use_bf16_matmul=use_bf16_matmul)


class AttentionModelJax:
    """JAX/Pallas re-implementation of AttentionModel.forward."""

    def __init__(self, vocab_size, hidden_size, nobjects, init_range=0.01, tied=True):
        self.hidden_size = hidden_size
        self.nwords = vocab_size
        self.nobjects = nobjects

        key = jax.random.PRNGKey(0)
        k_txt, k_dec, k_vis = jax.random.split(key, 3)

        # text_encoder.weight ~ U(-init_range, init_range), shape [vocab, hidden]
        self.text_encoder_weight = jax.random.uniform(
            k_txt, (vocab_size, hidden_size),
            minval=-init_range, maxval=init_range, dtype=jnp.float32,
        )
        # tied decoder shares the embedding weight
        self.text_decoder_weight = (
            self.text_encoder_weight
            if tied
            else jax.random.uniform(
                k_dec, (vocab_size, hidden_size),
                minval=-init_range, maxval=init_range, dtype=jnp.float32,
            )
        )
        # visual_features_extractor modeled as Embedding(nobjects, hidden_size)
        self.visual_encoder_weight = jax.random.uniform(
            k_vis, (nobjects, hidden_size),
            minval=-init_range, maxval=init_range, dtype=jnp.float32,
        )

    def forward(self, visual_input: jax.Array, text_input: jax.Array,
                use_bf16_matmul: bool = True) -> jax.Array:
        # visual_input: int32 [Nv, 1] (object ids); text_input: int32 [Nt, 1] (word ids)
        return _attention_forward(
            self.visual_encoder_weight, self.text_encoder_weight,
            visual_input, text_input, use_bf16_matmul=use_bf16_matmul,
        )


if __name__ == "__main__":
    vocab_size = 32
    hidden_size = 32
    nobjects = 16
    nv = 8   # number of visual tokens in the batch
    nt = 8   # number of text tokens in the batch

    model = AttentionModelJax(vocab_size, hidden_size, nobjects,
                              init_range=0.01, tied=True)

    key = jax.random.PRNGKey(0)
    k1, k2 = jax.random.split(key)
    visual_input = jax.random.randint(k1, (nv, 1), 0, nobjects, dtype=jnp.int32)
    text_input = jax.random.randint(k2, (nt, 1), 0, vocab_size, dtype=jnp.int32)

    # Default fast path: bf16 MXU operands, f32 accumulation.
    sims = model.forward(visual_input, text_input)
    sims = jax.block_until_ready(sims)

    # Plain-JAX reference.
    v_ref = jnp.squeeze(jnp.take(model.visual_encoder_weight, visual_input, axis=0), 1)
    t_ref = jnp.squeeze(jnp.take(model.text_encoder_weight, text_input, axis=0), 1)
    v_ref = v_ref / jnp.linalg.norm(v_ref, axis=1, keepdims=True)
    t_ref = t_ref / jnp.linalg.norm(t_ref, axis=1, keepdims=True)
    ref = v_ref @ t_ref.T

    assert sims.shape == (nv, nt)
    assert bool(jnp.all(jnp.isfinite(sims))), "non-finite values in output"
    assert jnp.allclose(sims, ref, atol=2e-2, rtol=2e-2), "bf16 path mismatch vs reference"

    # Full-precision path sanity check (same kernel, f32 operands).
    sims_f32 = jax.block_until_ready(
        model.forward(visual_input, text_input, use_bf16_matmul=False))
    assert jnp.allclose(sims_f32, ref, atol=1e-5, rtol=1e-5), "f32 path mismatch vs reference"

    print("KERNEL_OK")
</pallas_src>

<mosaic_0001>
module attributes {stable_mosaic.version = 11 : i64} {
  func.func @_sim_matmul_kernel(%arg0: i32, %arg1: i32, %arg2: memref<16x128xbf16, #tpu.memory_space<vmem>>, %arg3: memref<128x128xbf16, #tpu.memory_space<vmem>>, %arg4: memref<16x128xf32, #tpu.memory_space<vmem>>) attributes {dimension_semantics = [#tpu.dimension_semantics<parallel>, #tpu.dimension_semantics<parallel>], iteration_bounds = array<i64: 1, 1>, scalar_prefetch = 0 : i64, scratch_operands = 0 : i64, tpu.core_type = #tpu.core_type<tc>, window_params = [{transform_indices = @transform_0, window_bounds = array<i64: 16, 128>}, {transform_indices = @transform_1, window_bounds = array<i64: 128, 128>}, {transform_indices = @transform_2, window_bounds = array<i64: 16, 128>}]} {
    %c0 = arith.constant 0 : index
    %c0_0 = arith.constant 0 : index
    %0 = vector.load %arg2[%c0, %c0_0] : memref<16x128xbf16, #tpu.memory_space<vmem>>, vector<16x128xbf16>
    %c0_1 = arith.constant 0 : index
    %c0_2 = arith.constant 0 : index
    %1 = vector.load %arg3[%c0_1, %c0_2] : memref<128x128xbf16, #tpu.memory_space<vmem>>, vector<128x128xbf16>
    %cst = arith.constant dense<0.000000e+00> : vector<16x128xf32>
    %2 = tpu.matmul %0, %1, %cst {dimension_numbers = #tpu.dot_dimension_numbers<[1], [0], [0], [1], [0, 0, 1, 1], [], []>} : vector<16x128xbf16>, vector<128x128xbf16>, vector<16x128xf32> -> vector<16x128xf32>
    %c0_3 = arith.constant 0 : index
    %c0_4 = arith.constant 0 : index
    %3 = vector.load %arg4[%c0_3, %c0_4] : memref<16x128xf32, #tpu.memory_space<vmem>>, vector<16x128xf32>
    tpu.vector_store %arg4[%c0_3, %c0_4], %2 {strides = array<i32>} : memref<16x128xf32, #tpu.memory_space<vmem>>, vector<16x128xf32>,
    return
  }
  func.func @transform_0(%arg0: i32, %arg1: i32) -> (i32, i32) {
    %c0_i32 = arith.constant 0 : i32
    %c0_i32_0 = arith.constant 0 : i32
    return %arg0, %c0_i32 : i32, i32
  }
  func.func @transform_1(%arg0: i32, %arg1: i32) -> (i32, i32) {
    %c0_i32 = arith.constant 0 : i32
    %c0_i32_0 = arith.constant 0 : i32
    return %c0_i32, %arg1 : i32, i32
  }
  func.func @transform_2(%arg0: i32, %arg1: i32) -> (i32, i32) {
    %c0_i32 = arith.constant 0 : i32
    return %arg0, %arg1 : i32, i32
  }
}

</mosaic_0001>

<llo_original>
// kernel: _attention_forward.1
$region0: #{_attention_forward.1}
  #allocation0 [shape = 'u32[]', space=smem, size = 0x4, offset = 0x4, fixed_abs, tag = 'smem constant byte address 0x4 - core index']
  #allocation1 [shape = 'u32[72,128]{1,0:T(1,128)}', space=vmem, size = 0x9000, scoped, tag = 'internal scratch']
  %s0 = inlined_call_operand.vmem [shape: bf16[16,128], index: 0, kind: input, shape index: {}]
  %s1 = inlined_call_operand.vmem [shape: bf16[128,128], index: 1, kind: input, shape index: {}]
  %s2 = inlined_call_operand.vmem [shape: f32[16,128], index: 2, kind: output, shape index: {}]
  %s3 = sld [smem:[#allocation0]]
  $region18: #{_attention_forward.1} parent=0
    _
  %s5 = ssub.s32 1, %s3
  %s6 = scalar_select 0, %s5, %s3
  // Predicated region
  $region2: #{_attention_forward.1} parent=0 // pred_check
    _
  $region3: #{_attention_forward.1} parent=0 // pred_check_branch
    %8 = sbr.rel (0) target = $region5
  $region4: #{_attention_forward.1} parent=0 // pred_region
    _
  $region5: #{_attention_forward.1} parent=0 // pred_fallthru
    _
  // Predicated region
  $region6: #{_attention_forward.1} parent=0 // pred_check
    _
  $region7: #{_attention_forward.1} parent=0 // pred_check_branch
    %10 = sbr.rel (0) target = $region9
  $region8: #{_attention_forward.1} parent=0 // pred_region
    _
  $region9: #{_attention_forward.1} parent=0 // pred_fallthru
    _
  %v11 = vld [vmem:[%s0] sm:$0xf]
  %v12 = vld [vmem:[%s0 + $0x4] sm:$0xf]
  %v13 = vld [vmem:[%s1] sm:$0xf]
  %v14 = vld [vmem:[%s1 + $0x4] sm:$0xf]
  %v15 = vld [vmem:[%s1 + $0x8] sm:$0xf]
  %v16 = vld [vmem:[%s1 + $0xc] sm:$0xf]
  %v17 = vld [vmem:[%s1 + $0x10] sm:$0xf]
  %v18 = vld [vmem:[%s1 + $0x14] sm:$0xf]
  %v19 = vld [vmem:[%s1 + $0x18] sm:$0xf]
  %v20 = vld [vmem:[%s1 + $0x1c] sm:$0xf]
  %v21 = vld [vmem:[%s1 + $0x20] sm:$0xf]
  %v22 = vld [vmem:[%s1 + $0x24] sm:$0xf]
  %v23 = vld [vmem:[%s1 + $0x28] sm:$0xf]
  %v24 = vld [vmem:[%s1 + $0x2c] sm:$0xf]
  %v25 = vld [vmem:[%s1 + $0x30] sm:$0xf]
  %v26 = vld [vmem:[%s1 + $0x34] sm:$0xf]
  %v27 = vld [vmem:[%s1 + $0x38] sm:$0xf]
  %v28 = vld [vmem:[%s1 + $0x3c] sm:$0xf]
  %v31 = vunpack.c.l.b16 %v11
  %v32 = vunpack.c.l.b16 %v12
  %v33 = vpack.c.b16 %v32, %v31
  %v51 = vunpack.c.l.b16 %v13
  %v52 = vunpack.c.l.b16 %v14
  %v53 = vunpack.c.l.b16 %v15
  %v54 = vunpack.c.l.b16 %v16
  %v55 = vunpack.c.l.b16 %v17
  %v56 = vunpack.c.l.b16 %v18
  %v57 = vunpack.c.l.b16 %v19
  %v58 = vunpack.c.l.b16 %v20
  %v59 = vunpack.c.l.b16 %v21
  %v60 = vunpack.c.l.b16 %v22
  %v61 = vunpack.c.l.b16 %v23
  %v62 = vunpack.c.l.b16 %v24
  %v63 = vunpack.c.l.b16 %v25
  %v64 = vunpack.c.l.b16 %v26
  %v65 = vunpack.c.l.b16 %v27
  %v66 = vunpack.c.l.b16 %v28
  %v67 = vpack.c.b16 %v52, %v51
  %v68 = vpack.c.b16 %v54, %v53
  %v69 = vpack.c.b16 %v56, %v55
  %v70 = vpack.c.b16 %v58, %v57
  %v71 = vpack.c.b16 %v60, %v59
  %v72 = vpack.c.b16 %v62, %v61
  %v73 = vpack.c.b16 %v64, %v63
  %v74 = vpack.c.b16 %v66, %v65
  %83 = vmatpush.bf16.msra.mxu0 %v74
  %84 = vmatpush.bf16.msra.mxu0 %v73
  %85 = vmatpush.bf16.msra.mxu0 %v72
  %86 = vmatpush.bf16.msra.mxu0 %v71
  %87 = vmatpush.bf16.msra.mxu0 %v70
  %88 = vmatpush.bf16.msra.mxu0 %v69
  %89 = vmatpush.bf16.msra.mxu0 %v68
  %90 = vmatpush.bf16.msra.mxu0 %v67
  %91 = vmatmul.bf16.gmra.mxu0 %v33
  %v92 = vpop.f32.mrf.mxu0
  %v93 = vadd.f32 0.0, %v92
  %v94 = vpop.f32.mrf.mxu0
  %v95 = vadd.f32 0.0, %v94
  %96 = vdwg.mxu0
  %97 = vst [vmem:[%s2] sm:$0xff] %v93
  %98 = vst [vmem:[%s2 + $0x8] sm:$0xff] %v95
  // Predicated region
  $region10: #{_attention_forward.1} parent=0 // pred_check
    _
  $region11: #{_attention_forward.1} parent=0 // pred_check_branch
    %100 = sbr.rel (0) target = $region13
  $region12: #{_attention_forward.1} parent=0 // pred_region
    _
  $region13: #{_attention_forward.1} parent=0 // pred_fallthru
    _
  // Predicated region
  $region14: #{_attention_forward.1} parent=0 // pred_check
    _
  $region15: #{_attention_forward.1} parent=0 // pred_check_branch
    %102 = sbr.rel (0) target = $region17
  $region16: #{_attention_forward.1} parent=0 // pred_region
    _
  $region17: #{_attention_forward.1} parent=0 // pred_fallthru
    _

</llo_original>
